<compile_context>
chip_gen: v5e
topology: v5e:2x2
jax: 0.10.0
libtpu: 0.0.40
codegen_flags: <defaults>
</compile_context>

<pallas_src>
import jax
import jax.numpy as jnp
from jax.experimental import pallas as pl
from jax.experimental.pallas import tpu as pltpu


def _round_up(x, m):
    return ((x + m - 1) // m) * m


def _choose_tile(B, n_pad, dcat):
    """Batch tile: big enough to amortize per-grid-step overhead, small enough that
    double-buffered blocks stay well inside VMEM (sized for v7x's smaller budget)."""
    lane = _round_up(max(dcat, 1), 128)
    # approx bytes of one batch row across all (8,128)-tiled VMEM blocks (f32)
    per_row = 4 * (n_pad * lane      # slab block
                   + 8 * lane        # padded-question block
                   + n_pad * 128     # logit-bias block
                   + 8 * lane        # packed output block
                   + n_pad * 128)    # attention-weight output block
    budget = 8 * 1024 * 1024         # target for the double-buffered working set
    tb = max(8, min(128, budget // (2 * per_row)))
    tb = max(8, (tb // 8) * 8)
    return int(min(tb, _round_up(B, 8)))


def stacked_attention_kernel(slab_ref, ques_ref, bias_ref,
                             wi_ref, wq_ref, bc_ref, wa_ref,
                             out_ref, attn_ref):
    """One grid step == TB batch elements.

    slab_ref : (TB, Np, Dcat)  [obj_feats | region_mask] concatenated on lanes
    ques_ref : (TB, 1,  Dcat)  ques_emb zero-padded to Dcat lanes
    bias_ref : (TB, Np, 1)     additive logit bias: b_attn + (-1e30 where masked)
    wi_ref   : (Dcat, Dmid)    ff_image weight (zero rows on region lanes)
    wq_ref   : (Dcat, Dmid)    ff_ques  weight (zero rows on region lanes)
    bc_ref   : (1, Dmid)       b_img + b_ques
    wa_ref   : (1, Dmid)       attn_layer weight row
    out_ref  : (TB, 1,  Dcat)  packed [query | pred_attn_mask]
    attn_ref : (TB, Np, 1)     attention weights
    """
    tb, n, dcat = slab_ref.shape

    slab = slab_ref[...]                                   # (TB, Np, Dcat)
    ques = ques_ref[...]                                   # (TB, 1,  Dcat)

    # Fold (TB, Np) into the matmul M dimension (Np % 8 == 0 -> layout-free reshape).
    rows = slab.reshape(tb * n, dcat)                      # (TB*Np, Dcat)
    ques_rows = jnp.broadcast_to(ques, (tb, n, dcat)).reshape(tb * n, dcat)

    # ff_image / ff_ques projections on the MXU; f32 accumulation.
    img_proj = jnp.dot(rows, wi_ref[...], preferred_element_type=jnp.float32)
    ques_proj = jnp.dot(ques_rows, wq_ref[...], preferred_element_type=jnp.float32)
    combined = jnp.tanh(img_proj + ques_proj + bc_ref[...])  # (TB*Np, Dmid)
    # (dropout == identity at inference)

    # Attention logits: VPU multiply + lane reduce instead of a width-1 MXU matmul.
    logits = jnp.sum(combined * wa_ref[...], axis=-1, keepdims=True)  # (TB*Np, 1)
    logits = logits.reshape(tb, n, 1) + bias_ref[...]      # + b_attn + mask bias

    # Masked softmax over objects (sublane axis), numerically stabilized.
    m = jnp.max(logits, axis=1, keepdims=True)             # (TB, 1, 1)
    e = jnp.exp(logits - m)                                # (TB, Np, 1)
    denom = jnp.sum(e, axis=1, keepdims=True)              # (TB, 1, 1)
    inv = pl.reciprocal(denom, approx=True)
    inv = inv * (2.0 - denom * inv)                        # Newton step -> ~f32 exact
    attn = e * inv                                         # (TB, Np, 1)

    # Fused weighted sum over the [obj | region] slab, then add the question
    # (ques is zero on region lanes, so only the query half is shifted).
    attended = jnp.sum(attn * slab, axis=1, keepdims=True)  # (TB, 1, Dcat)
    out_ref[...] = attended + ques
    attn_ref[...] = attn


def stacked_attention(obj_feats, ques_emb, obj_mask, obj_region_mask, params):
    B, N, Din = obj_feats.shape
    Dmid = params["w_img"].shape[1]
    H, W = obj_region_mask.shape[-2], obj_region_mask.shape[-1]
    HW = H * W
    Dcat = Din + HW
    f32 = jnp.float32
    NEG = -1e30

    Np = _round_up(max(N, 8), 8)           # pad objects to a sublane multiple
    TB = _choose_tile(B, Np, Dcat)          # batch tile per grid step
    Bp = _round_up(B, TB)

    region = obj_region_mask.reshape(B, N, HW).astype(f32)
    slab = jnp.concatenate([obj_feats.astype(f32), region], axis=-1)   # (B, N, Dcat)
    slab = jnp.pad(slab, ((0, Bp - B), (0, Np - N), (0, 0)))

    ques = jnp.pad(ques_emb.astype(f32), ((0, Bp - B), (0, HW)))        # (Bp, Dcat)
    ques = ques.reshape(Bp, 1, Dcat)

    # Additive logit bias: -1e30 on masked / padded objects, attn-layer bias folded in.
    bias = jnp.where(obj_mask, NEG, 0.0).astype(f32)                    # (B, N)
    bias = jnp.pad(bias, ((0, Bp - B), (0, Np - N)), constant_values=NEG)
    bias = (bias + params["b_attn"].reshape(1, 1)).reshape(Bp, Np, 1)

    # Zero-pad projection weights over the region lanes of the slab.
    w_img = jnp.pad(params["w_img"].astype(f32), ((0, HW), (0, 0)))     # (Dcat, Dmid)
    w_ques = jnp.pad(params["w_ques"].astype(f32), ((0, HW), (0, 0)))   # (Dcat, Dmid)
    b_comb = (params["b_img"] + params["b_ques"]).reshape(1, Dmid).astype(f32)
    w_attn = params["w_attn"].reshape(1, Dmid).astype(f32)

    batch3 = lambda b: (b, 0, 0)
    full2 = lambda b: (0, 0)

    out_shapes = (
        jax.ShapeDtypeStruct((Bp, 1, Dcat), f32),   # packed [query | pred]
        jax.ShapeDtypeStruct((Bp, Np, 1), f32),     # attention weights
    )

    packed, attn_col = pl.pallas_call(
        stacked_attention_kernel,
        out_shape=out_shapes,
        grid_spec=pltpu.PrefetchScalarGridSpec(
            num_scalar_prefetch=0,
            grid=(Bp // TB,),
            in_specs=[
                pl.BlockSpec((TB, Np, Dcat), batch3),   # slab
                pl.BlockSpec((TB, 1, Dcat), batch3),    # padded question
                pl.BlockSpec((TB, Np, 1), batch3),      # logit bias
                pl.BlockSpec((Dcat, Dmid), full2),      # W_img (padded)
                pl.BlockSpec((Dcat, Dmid), full2),      # W_ques (padded)
                pl.BlockSpec((1, Dmid), full2),         # b_img + b_ques
                pl.BlockSpec((1, Dmid), full2),         # attn weight row
            ],
            out_specs=[
                pl.BlockSpec((TB, 1, Dcat), batch3),
                pl.BlockSpec((TB, Np, 1), batch3),
            ],
        ),
        compiler_params=pltpu.CompilerParams(
            dimension_semantics=("parallel",),
            vmem_limit_bytes=32 * 1024 * 1024,
        ),
    )(slab, ques, bias, w_img, w_ques, b_comb, w_attn)

    packed = packed.reshape(Bp, Dcat)[:B]
    query = packed[:, :Din]
    pred_attn_mask = packed[:, Din:].reshape(B, H, W)
    attn_wt = attn_col[:B, :N, 0]
    return query, pred_attn_mask, attn_wt


def _weight_norm(v, g):
    """PyTorch weight_norm (dim=0): w[i,:] = g[i] * v[i,:] / ||v[i,:]||; v is (out, in)."""
    norm = jnp.sqrt(jnp.sum(v * v, axis=1, keepdims=True))
    return (g[:, None] / norm) * v


def make_params(key, san_dim_in, san_dim_mid):
    ks = jax.random.split(key, 6)
    v_img = jax.random.normal(ks[0], (san_dim_mid, san_dim_in), jnp.float32) * 0.1
    g_img = 1.0 + 0.05 * jax.random.normal(ks[1], (san_dim_mid,), jnp.float32)
    v_ques = jax.random.normal(ks[2], (san_dim_mid, san_dim_in), jnp.float32) * 0.1
    g_ques = 1.0 + 0.05 * jax.random.normal(ks[3], (san_dim_mid,), jnp.float32)
    v_attn = jax.random.normal(ks[4], (1, san_dim_mid), jnp.float32) * 0.1
    g_attn = jnp.ones((1,), jnp.float32)

    w_img = _weight_norm(v_img, g_img).T        # (Din, Dmid)
    w_ques = _weight_norm(v_ques, g_ques).T     # (Din, Dmid)
    w_attn = _weight_norm(v_attn, g_attn).T     # (Dmid, 1)

    b_img = 0.01 * jax.random.normal(ks[5], (san_dim_mid,), jnp.float32)
    b_ques = jnp.zeros((san_dim_mid,), jnp.float32)
    b_attn = jnp.zeros((1,), jnp.float32)

    return {
        "w_img": w_img, "b_img": b_img.reshape(1, san_dim_mid),
        "w_ques": w_ques, "b_ques": b_ques.reshape(1, san_dim_mid),
        "w_attn": w_attn, "b_attn": b_attn.reshape(1, 1),
    }


def reference_forward(obj_feats, ques_emb, obj_mask, obj_region_mask, params):
    """Pure-JAX reference mirroring the PyTorch forward (eval mode)."""
    B, N, _ = obj_feats.shape
    img_proj = obj_feats @ params["w_img"] + params["b_img"]
    ques_proj = (ques_emb @ params["w_ques"] + params["b_ques"])[:, None, :]
    combined = jnp.tanh(img_proj + ques_proj)
    logits = (combined @ params["w_attn"] + params["b_attn"])[..., 0]
    logits = jnp.where(obj_mask, -jnp.inf, logits)
    attn = jax.nn.softmax(logits, axis=1)
    attended = jnp.einsum("bn,bnd->bd", attn, obj_feats)
    query = attended + ques_emb
    region_flat = obj_region_mask.reshape(B, N, -1)
    pred = jnp.einsum("bn,bnp->bp", attn, region_flat).reshape(
        B, obj_region_mask.shape[-2], obj_region_mask.shape[-1])
    return query, pred, attn


if __name__ == "__main__":
    B, N, Din, Dmid, H, W = 2, 8, 32, 16, 4, 4

    key = jax.random.PRNGKey(0)
    k_obj, k_ques, k_reg, k_par = jax.random.split(key, 4)

    obj_feats = jax.random.normal(k_obj, (B, N, Din), jnp.float32)
    ques_emb = jax.random.normal(k_ques, (B, Din), jnp.float32)
    # mask out the last two objects in every batch element (bool, True == masked)
    obj_mask = jnp.broadcast_to(jnp.arange(N)[None, :] >= N - 2, (B, N))
    obj_region_mask = (jax.random.uniform(k_reg, (B, N, H, W)) > 0.5).astype(jnp.float32)

    params = make_params(k_par, Din, Dmid)

    query, pred_attn_mask, attn_wt = stacked_attention(
        obj_feats, ques_emb, obj_mask, obj_region_mask, params)
    jax.block_until_ready((query, pred_attn_mask, attn_wt))

    q_ref, p_ref, a_ref = reference_forward(
        obj_feats, ques_emb, obj_mask, obj_region_mask, params)
    assert jnp.allclose(query, q_ref, atol=1e-4, rtol=1e-4)
    assert jnp.allclose(pred_attn_mask, p_ref, atol=1e-4, rtol=1e-4)
    assert jnp.allclose(attn_wt, a_ref, atol=1e-4, rtol=1e-4)

    print("KERNEL_OK")
</pallas_src>

<mosaic_0001>
module attributes {stable_mosaic.version = 11 : i64} {
  func.func @stacked_attention_kernel(%arg0: i32, %arg1: memref<8x8x48xf32, #tpu.memory_space<vmem>>, %arg2: memref<8x1x48xf32, #tpu.memory_space<vmem>>, %arg3: memref<8x8x1xf32, #tpu.memory_space<vmem>>, %arg4: memref<48x16xf32, #tpu.memory_space<vmem>>, %arg5: memref<48x16xf32, #tpu.memory_space<vmem>>, %arg6: memref<1x16xf32, #tpu.memory_space<vmem>>, %arg7: memref<1x16xf32, #tpu.memory_space<vmem>>, %arg8: memref<8x1x48xf32, #tpu.memory_space<vmem>>, %arg9: memref<8x8x1xf32, #tpu.memory_space<vmem>>) attributes {dimension_semantics = [#tpu.dimension_semantics<parallel>], iteration_bounds = array<i64: 1>, scalar_prefetch = 0 : i64, scratch_operands = 0 : i64, tpu.core_type = #tpu.core_type<tc>, window_params = [{transform_indices = @transform_0, window_bounds = array<i64: 8, 8, 48>}, {transform_indices = @transform_1, window_bounds = array<i64: 8, 1, 48>}, {transform_indices = @transform_2, window_bounds = array<i64: 8, 8, 1>}, {pipeline_mode = #tpu.pipeline_mode<synchronous>, transform_indices = @transform_3, window_bounds = array<i64: 48, 16>}, {pipeline_mode = #tpu.pipeline_mode<synchronous>, transform_indices = @transform_4, window_bounds = array<i64: 48, 16>}, {pipeline_mode = #tpu.pipeline_mode<synchronous>, transform_indices = @transform_5, window_bounds = array<i64: 1, 16>}, {pipeline_mode = #tpu.pipeline_mode<synchronous>, transform_indices = @transform_6, window_bounds = array<i64: 1, 16>}, {transform_indices = @transform_7, window_bounds = array<i64: 8, 1, 48>}, {transform_indices = @transform_8, window_bounds = array<i64: 8, 8, 1>}]} {
    %c0 = arith.constant 0 : index
    %c0_0 = arith.constant 0 : index
    %c0_1 = arith.constant 0 : index
    %0 = vector.load %arg1[%c0, %c0_0, %c0_1] : memref<8x8x48xf32, #tpu.memory_space<vmem>>, vector<8x8x48xf32>
    %c0_2 = arith.constant 0 : index
    %c0_3 = arith.constant 0 : index
    %c0_4 = arith.constant 0 : index
    %1 = vector.load %arg2[%c0_2, %c0_3, %c0_4] : memref<8x1x48xf32, #tpu.memory_space<vmem>>, vector<8x1x48xf32>
    %2 = vector.shape_cast %0 : vector<8x8x48xf32> to vector<64x48xf32>
    %3 = vector.shape_cast %1 : vector<8x1x48xf32> to vector<8x1x48xf32>
    %4 = vector.broadcast %3 : vector<8x1x48xf32> to vector<8x8x48xf32>
    %5 = vector.shape_cast %4 : vector<8x8x48xf32> to vector<64x48xf32>
    %c0_5 = arith.constant 0 : index
    %c0_6 = arith.constant 0 : index
    %6 = vector.load %arg4[%c0_5, %c0_6] : memref<48x16xf32, #tpu.memory_space<vmem>>, vector<48x16xf32>
    %cst = arith.constant dense<0.000000e+00> : vector<64x16xf32>
    %7 = tpu.matmul %2, %6, %cst {dimension_numbers = #tpu.dot_dimension_numbers<[1], [0], [0], [1], [0, 0, 1, 1], [], []>} : vector<64x48xf32>, vector<48x16xf32>, vector<64x16xf32> -> vector<64x16xf32>
    %c0_7 = arith.constant 0 : index
    %c0_8 = arith.constant 0 : index
    %8 = vector.load %arg5[%c0_7, %c0_8] : memref<48x16xf32, #tpu.memory_space<vmem>>, vector<48x16xf32>
    %cst_9 = arith.constant dense<0.000000e+00> : vector<64x16xf32>
    %9 = tpu.matmul %5, %8, %cst_9 {dimension_numbers = #tpu.dot_dimension_numbers<[1], [0], [0], [1], [0, 0, 1, 1], [], []>} : vector<64x48xf32>, vector<48x16xf32>, vector<64x16xf32> -> vector<64x16xf32>
    %10 = arith.addf %7, %9 : vector<64x16xf32>
    %c0_10 = arith.constant 0 : index
    %c0_11 = arith.constant 0 : index
    %11 = vector.load %arg6[%c0_10, %c0_11] : memref<1x16xf32, #tpu.memory_space<vmem>>, vector<1x16xf32>
    %12 = vector.broadcast %11 : vector<1x16xf32> to vector<64x16xf32>
    %13 = arith.addf %10, %12 : vector<64x16xf32>
    %14 = math.tanh %13 : vector<64x16xf32>
    %c0_12 = arith.constant 0 : index
    %c0_13 = arith.constant 0 : index
    %15 = vector.load %arg7[%c0_12, %c0_13] : memref<1x16xf32, #tpu.memory_space<vmem>>, vector<1x16xf32>
    %16 = vector.broadcast %15 : vector<1x16xf32> to vector<64x16xf32>
    %17 = arith.mulf %14, %16 : vector<64x16xf32>
    %cst_14 = arith.constant dense<0.000000e+00> : vector<64xf32>
    %18 = vector.multi_reduction <add>, %17, %cst_14 [1] : vector<64x16xf32> to vector<64xf32>
    %19 = vector.shape_cast %18 : vector<64xf32> to vector<64x1xf32>
    %20 = vector.shape_cast %19 : vector<64x1xf32> to vector<8x8x1xf32>
    %c0_15 = arith.constant 0 : index
    %c0_16 = arith.constant 0 : index
    %c0_17 = arith.constant 0 : index
    %21 = vector.load %arg3[%c0_15, %c0_16, %c0_17] : memref<8x8x1xf32, #tpu.memory_space<vmem>>, vector<8x8x1xf32>
    %22 = arith.addf %20, %21 : vector<8x8x1xf32>
    %cst_18 = arith.constant dense<0xFF800000> : vector<8x1xf32>
    %23 = vector.multi_reduction <maximumf>, %22, %cst_18 [1] : vector<8x8x1xf32> to vector<8x1xf32>
    %24 = vector.shape_cast %23 : vector<8x1xf32> to vector<8x1x1xf32>
    %25 = vector.broadcast %24 : vector<8x1x1xf32> to vector<8x8x1xf32>
    %26 = arith.subf %22, %25 : vector<8x8x1xf32>
    %27 = math.exp %26 : vector<8x8x1xf32>
    %cst_19 = arith.constant dense<0.000000e+00> : vector<8x1xf32>
    %28 = vector.multi_reduction <add>, %27, %cst_19 [1] : vector<8x8x1xf32> to vector<8x1xf32>
    %29 = vector.shape_cast %28 : vector<8x1xf32> to vector<8x1x1xf32>
    %30 = tpu.reciprocal %29 {approx = true} : vector<8x1x1xf32> -> vector<8x1x1xf32>
    %31 = arith.mulf %29, %30 : vector<8x1x1xf32>
    %cst_20 = arith.constant 2.000000e+00 : f32
    %32 = vector.broadcast %cst_20 : f32 to vector<8x1x1xf32>
    %33 = arith.subf %32, %31 : vector<8x1x1xf32>
    %34 = arith.mulf %30, %33 : vector<8x1x1xf32>
    %35 = vector.broadcast %34 : vector<8x1x1xf32> to vector<8x8x1xf32>
    %36 = arith.mulf %27, %35 : vector<8x8x1xf32>
    %37 = vector.broadcast %36 : vector<8x8x1xf32> to vector<8x8x48xf32>
    %38 = arith.mulf %37, %0 : vector<8x8x48xf32>
    %cst_21 = arith.constant dense<0.000000e+00> : vector<8x48xf32>
    %39 = vector.multi_reduction <add>, %38, %cst_21 [1] : vector<8x8x48xf32> to vector<8x48xf32>
    %40 = vector.shape_cast %39 : vector<8x48xf32> to vector<8x1x48xf32>
    %41 = arith.addf %40, %1 : vector<8x1x48xf32>
    %c0_22 = arith.constant 0 : index
    %c0_23 = arith.constant 0 : index
    %c0_24 = arith.constant 0 : index
    %42 = vector.load %arg8[%c0_22, %c0_23, %c0_24] : memref<8x1x48xf32, #tpu.memory_space<vmem>>, vector<8x1x48xf32>
    tpu.vector_store %arg8[%c0_22, %c0_23, %c0_24], %41 {strides = array<i32>} : memref<8x1x48xf32, #tpu.memory_space<vmem>>, vector<8x1x48xf32>,
    %c0_25 = arith.constant 0 : index
    %c0_26 = arith.constant 0 : index
    %c0_27 = arith.constant 0 : index
    %43 = vector.load %arg9[%c0_25, %c0_26, %c0_27] : memref<8x8x1xf32, #tpu.memory_space<vmem>>, vector<8x8x1xf32>
    tpu.vector_store %arg9[%c0_25, %c0_26, %c0_27], %36 {strides = array<i32>} : memref<8x8x1xf32, #tpu.memory_space<vmem>>, vector<8x8x1xf32>,
    return
  }
  func.func @transform_0(%arg0: i32) -> (i32, i32, i32) {
    %c0_i32 = arith.constant 0 : i32
    %c0_i32_0 = arith.constant 0 : i32
    %c0_i32_1 = arith.constant 0 : i32
    return %arg0, %c0_i32, %c0_i32_0 : i32, i32, i32
  }
  func.func @transform_1(%arg0: i32) -> (i32, i32, i32) {
    %c0_i32 = arith.constant 0 : i32
    %c0_i32_0 = arith.constant 0 : i32
    %c0_i32_1 = arith.constant 0 : i32
    return %arg0, %c0_i32, %c0_i32_0 : i32, i32, i32
  }
  func.func @transform_2(%arg0: i32) -> (i32, i32, i32) {
    %c0_i32 = arith.constant 0 : i32
    %c0_i32_0 = arith.constant 0 : i32
    %c0_i32_1 = arith.constant 0 : i32
    return %arg0, %c0_i32, %c0_i32_0 : i32, i32, i32
  }
  func.func @transform_3(%arg0: i32) -> (i32, i32) {
    %c0_i32 = arith.constant 0 : i32
    %c0_i32_0 = arith.constant 0 : i32
    %c0_i32_1 = arith.constant 0 : i32
    return %c0_i32, %c0_i32_0 : i32, i32
  }
  func.func @transform_4(%arg0: i32) -> (i32, i32) {
    %c0_i32 = arith.constant 0 : i32
    %c0_i32_0 = arith.constant 0 : i32
    %c0_i32_1 = arith.constant 0 : i32
    return %c0_i32, %c0_i32_0 : i32, i32
  }
  func.func @transform_5(%arg0: i32) -> (i32, i32) {
    %c0_i32 = arith.constant 0 : i32
    %c0_i32_0 = arith.constant 0 : i32
    %c0_i32_1 = arith.constant 0 : i32
    return %c0_i32, %c0_i32_0 : i32, i32
  }
  func.func @transform_6(%arg0: i32) -> (i32, i32) {
    %c0_i32 = arith.constant 0 : i32
    %c0_i32_0 = arith.constant 0 : i32
    %c0_i32_1 = arith.constant 0 : i32
    return %c0_i32, %c0_i32_0 : i32, i32
  }
  func.func @transform_7(%arg0: i32) -> (i32, i32, i32) {
    %c0_i32 = arith.constant 0 : i32
    %c0_i32_0 = arith.constant 0 : i32
    %c0_i32_1 = arith.constant 0 : i32
    return %arg0, %c0_i32, %c0_i32_0 : i32, i32, i32
  }
  func.func @transform_8(%arg0: i32) -> (i32, i32, i32) {
    %c0_i32 = arith.constant 0 : i32
    %c0_i32_0 = arith.constant 0 : i32
    %c0_i32_1 = arith.constant 0 : i32
    return %arg0, %c0_i32, %c0_i32_0 : i32, i32, i32
  }
}

</mosaic_0001>

<llo_original>
// kernel: tpu_custom_call.1
$region0: #{tpu_custom_call.1}
  #allocation0 [shape = 'u32[]', space=smem, size = 0x4, offset = 0x4, fixed_abs, tag = 'smem constant byte address 0x4 - core index']
  #allocation1 [shape = 'u32[72,128]{1,0:T(1,128)}', space=vmem, size = 0x9000, scoped, tag = 'internal scratch']
  %s0 = inlined_call_operand.vmem [shape: f32[8,8,48], index: 0, kind: input, shape index: {}]
  %s1 = inlined_call_operand.vmem [shape: f32[8,1,48], index: 1, kind: input, shape index: {}]
  %s2 = inlined_call_operand.vmem [shape: f32[8,8,1], index: 2, kind: input, shape index: {}]
  %s3 = inlined_call_operand.vmem [shape: f32[48,16], index: 3, kind: input, shape index: {}]
  %s4 = inlined_call_operand.vmem [shape: f32[48,16], index: 4, kind: input, shape index: {}]
  %s5 = inlined_call_operand.vmem [shape: f32[1,16], index: 5, kind: input, shape index: {}]
  %s6 = inlined_call_operand.vmem [shape: f32[1,16], index: 6, kind: input, shape index: {}]
  %s7 = inlined_call_operand.hbm [shape: f32[8,1,48], index: 7, kind: output, shape index: {0}]
  %s8 = inlined_call_operand.vmem [shape: f32[8,8,1], index: 8, kind: output, shape index: {1}]
  %9 = xla_tuple %s7, %s8
  %s10 = sld [smem:[#allocation0]]
  $region46: #{tpu_custom_call.1} parent=0
    _
  %s12 = ssub.s32 1, %s10
  %s13 = scalar_select 0, %s12, %s10
  $region1: #{tpu_custom_call.1} parent=0
    #allocation2 [shape = 'u8[4096]{0}', space=vmem, size = 0x1000, scoped, tag = 'output window, operand 0, single buffered']
    #allocation3 [shape = 's32[1]{0}', space=sflag, size = 0x4, scoped, tag = 'scoped memory for tpu_custom_call.1']
    %14 = vsyncpa [#allocation3], 0
    // Predicated region
    $region2: #{tpu_custom_call.1} parent=1 // pred_check
      _
    $region3: #{tpu_custom_call.1} parent=1 // pred_check_branch
      %16 = sbr.rel (0) target = $region5
    $region4: #{tpu_custom_call.1} parent=1 // pred_region
      _
    $region5: #{tpu_custom_call.1} parent=1 // pred_fallthru
      _
    // Predicated region
    $region6: #{tpu_custom_call.1} parent=1 // pred_check
      _
    $region7: #{tpu_custom_call.1} parent=1 // pred_check_branch
      %18 = sbr.rel (0) target = $region9
    $region8: #{tpu_custom_call.1} parent=1 // pred_region
      _
    $region9: #{tpu_custom_call.1} parent=1 // pred_fallthru
      _
    // Predicated region
    $region10: #{tpu_custom_call.1} parent=1 // pred_check
      _
    $region11: #{tpu_custom_call.1} parent=1 // pred_check_branch
      %20 = sbr.rel (0) target = $region13
    $region12: #{tpu_custom_call.1} parent=1 // pred_region
      _
    $region13: #{tpu_custom_call.1} parent=1 // pred_fallthru
      _
    // Predicated region
    $region14: #{tpu_custom_call.1} parent=1 // pred_check
      _
    $region15: #{tpu_custom_call.1} parent=1 // pred_check_branch
      %22 = sbr.rel (0) target = $region17
    $region16: #{tpu_custom_call.1} parent=1 // pred_region
      _
    $region17: #{tpu_custom_call.1} parent=1 // pred_fallthru
      _
    // Predicated region
    $region18: #{tpu_custom_call.1} parent=1 // pred_check
      _
    $region19: #{tpu_custom_call.1} parent=1 // pred_check_branch
      %24 = sbr.rel (0) target = $region21
    $region20: #{tpu_custom_call.1} parent=1 // pred_region
      _
    $region21: #{tpu_custom_call.1} parent=1 // pred_fallthru
      _
    // Predicated region
    $region22: #{tpu_custom_call.1} parent=1 // pred_check
      _
    $region23: #{tpu_custom_call.1} parent=1 // pred_check_branch
      %26 = sbr.rel (0) target = $region25
    $region24: #{tpu_custom_call.1} parent=1 // pred_region
      _
    $region25: #{tpu_custom_call.1} parent=1 // pred_fallthru
      _
    // Predicated region
    $region26: #{tpu_custom_call.1} parent=1 // pred_check
      _
    $region27: #{tpu_custom_call.1} parent=1 // pred_check_branch
      %28 = sbr.rel (0) target = $region29
    $region28: #{tpu_custom_call.1} parent=1 // pred_region
      _
    $region29: #{tpu_custom_call.1} parent=1 // pred_fallthru
      _
    %v29 = vld [vmem:[%s0] sm:$0xff]
    %v30 = vld [vmem:[%s0 + $0x8] sm:$0xff]
    %v31 = vld [vmem:[%s0 + $0x10] sm:$0xff]
    %v32 = vld [vmem:[%s0 + $0x18] sm:$0xff]
    %v33 = vld [vmem:[%s0 + $0x20] sm:$0xff]
    %v34 = vld [vmem:[%s0 + $0x28] sm:$0xff]
    %v35 = vld [vmem:[%s0 + $0x30] sm:$0xff]
    %v36 = vld [vmem:[%s0 + $0x38] sm:$0xff]
    %v37 = vld [vmem:[%s1] sm:$0x1]
    %v38 = vld [vmem:[%s1 + $0x1] sm:$0x1]
    %v39 = vld [vmem:[%s1 + $0x2] sm:$0x1]
    %v40 = vld [vmem:[%s1 + $0x3] sm:$0x1]
    %v41 = vld [vmem:[%s1 + $0x4] sm:$0x1]
    %v42 = vld [vmem:[%s1 + $0x5] sm:$0x1]
    %v43 = vld [vmem:[%s1 + $0x6] sm:$0x1]
    %v44 = vld [vmem:[%s1 + $0x7] sm:$0x1]
    %v53 = vperm.slane %v37, 0
    %v54 = vperm.slane %v38, 0
    %v55 = vperm.slane %v39, 0
    %v56 = vperm.slane %v40, 0
    %v57 = vperm.slane %v41, 0
    %v58 = vperm.slane %v42, 0
    %v59 = vperm.slane %v43, 0
    %v60 = vperm.slane %v44, 0
    %v61 = vld [vmem:[%s3] sm:$0xff]
    %v62 = vld [vmem:[%s3 + $0x8] sm:$0xff]
    %v63 = vld [vmem:[%s3 + $0x10] sm:$0xff]
    %v64 = vld [vmem:[%s3 + $0x18] sm:$0xff]
    %v65 = vld [vmem:[%s3 + $0x20] sm:$0xff]
    %v66 = vld [vmem:[%s3 + $0x28] sm:$0xff]
    %v67 = vld [vmem:[%s4] sm:$0xff]
    %v68 = vld [vmem:[%s4 + $0x8] sm:$0xff]
    %v69 = vld [vmem:[%s4 + $0x10] sm:$0xff]
    %v70 = vld [vmem:[%s4 + $0x18] sm:$0xff]
    %v71 = vld [vmem:[%s4 + $0x20] sm:$0xff]
    %v72 = vld [vmem:[%s4 + $0x28] sm:$0xff]
    %vm73 = vcmask 392192
    %v74 = vsel %vm73, %v53, 0
    %v76 = vsel %vm73, %v54, 0
    %v78 = vsel %vm73, %v55, 0
    %v80 = vsel %vm73, %v56, 0
    %v82 = vsel %vm73, %v57, 0
    %v84 = vsel %vm73, %v58, 0
    %v86 = vsel %vm73, %v59, 0
    %v88 = vsel %vm73, %v60, 0
    %90 = vmatpush.msra.mxu0 0.0
    %91 = vmatpush.msra.mxu0 0.0
    %92 = vmatpush.msra.mxu0 0.0
    %93 = vmatpush.msra.mxu0 0.0
    %94 = vmatpush.msra.mxu0 0.0
    %95 = vmatpush.msra.mxu0 0.0
    %96 = vmatpush.msra.mxu0 0.0
    %97 = vmatpush.msra.mxu0 0.0
    %98 = vmatpush.msra.mxu0 0.0
    %99 = vmatpush.msra.mxu0 0.0
    %100 = vmatpush.msra.mxu0 %v72
    %101 = vmatpush.msra.mxu0 %v71
    %102 = vmatpush.msra.mxu0 %v70
    %103 = vmatpush.msra.mxu0 %v69
    %104 = vmatpush.msra.mxu0 %v68
    %105 = vmatpush.msra.mxu0 %v67
    %106 = vmatmul.f32.gmra.mxu0 %v74
    %v107 = vpop.f32.mrf.mxu0
    %v108 = vadd.f32 0.0, %v107
    %109 = vmatmul.f32.gmra.mxu0 %v76
    %v110 = vpop.f32.mrf.mxu0
    %v111 = vadd.f32 0.0, %v110
    %112 = vmatmul.f32.gmra.mxu0 %v78
    %v113 = vpop.f32.mrf.mxu0
    %v114 = vadd.f32 0.0, %v113
    %115 = vmatmul.f32.gmra.mxu0 %v80
    %v116 = vpop.f32.mrf.mxu0
    %v117 = vadd.f32 0.0, %v116
    %118 = vmatmul.f32.gmra.mxu0 %v82
    %v119 = vpop.f32.mrf.mxu0
    %v120 = vadd.f32 0.0, %v119
    %121 = vmatmul.f32.gmra.mxu0 %v84
    %v122 = vpop.f32.mrf.mxu0
    %v123 = vadd.f32 0.0, %v122
    %124 = vmatmul.f32.gmra.mxu0 %v86
    %v125 = vpop.f32.mrf.mxu0
    %v126 = vadd.f32 0.0, %v125
    %127 = vmatmul.f32.gmra.mxu0 %v88
    %v128 = vpop.f32.mrf.mxu0
    %v129 = vadd.f32 0.0, %v128
    %130 = vdwg.mxu0
    %v132 = vsel %vm73, %v29, 0
    %v135 = vsel %vm73, %v30, 0
    %v138 = vsel %vm73, %v31, 0
    %v141 = vsel %vm73, %v32, 0
    %v144 = vsel %vm73, %v33, 0
    %v147 = vsel %vm73, %v34, 0
    %v150 = vsel %vm73, %v35, 0
    %v153 = vsel %vm73, %v36, 0
    %155 = vmatpush.msra.mxu0 0.0
    %156 = vmatpush.msra.mxu0 0.0
    %157 = vmatpush.msra.mxu0 0.0
    %158 = vmatpush.msra.mxu0 0.0
    %159 = vmatpush.msra.mxu0 0.0
    %160 = vmatpush.msra.mxu0 0.0
    %161 = vmatpush.msra.mxu0 0.0
    %162 = vmatpush.msra.mxu0 0.0
    %163 = vmatpush.msra.mxu0 0.0
    %164 = vmatpush.msra.mxu0 0.0
    %165 = vmatpush.msra.mxu0 %v66
    %166 = vmatpush.msra.mxu0 %v65
    %167 = vmatpush.msra.mxu0 %v64
    %168 = vmatpush.msra.mxu0 %v63
    %169 = vmatpush.msra.mxu0 %v62
    %170 = vmatpush.msra.mxu0 %v61
    %171 = vmatmul.f32.gmra.mxu0 %v132
    %v172 = vpop.f32.mrf.mxu0
    %v173 = vadd.f32 %v108, %v172
    %174 = vmatmul.f32.gmra.mxu0 %v135
    %v175 = vpop.f32.mrf.mxu0
    %v176 = vadd.f32 %v111, %v175
    %177 = vmatmul.f32.gmra.mxu0 %v138
    %v178 = vpop.f32.mrf.mxu0
    %v179 = vadd.f32 %v114, %v178
    %180 = vmatmul.f32.gmra.mxu0 %v141
    %v181 = vpop.f32.mrf.mxu0
    %v182 = vadd.f32 %v117, %v181
    %183 = vmatmul.f32.gmra.mxu0 %v144
    %v184 = vpop.f32.mrf.mxu0
    %v185 = vadd.f32 %v120, %v184
    %186 = vmatmul.f32.gmra.mxu0 %v147
    %v187 = vpop.f32.mrf.mxu0
    %v188 = vadd.f32 %v123, %v187
    %189 = vmatmul.f32.gmra.mxu0 %v150
    %v190 = vpop.f32.mrf.mxu0
    %v191 = vadd.f32 %v126, %v190
    %192 = vmatmul.f32.gmra.mxu0 %v153
    %v193 = vpop.f32.mrf.mxu0
    %v194 = vadd.f32 %v129, %v193
    %195 = vdwg.mxu0
    %v196 = vld [vmem:[%s5] sm:$0x1]
    %v198 = vperm.slane %v196, 0
    %v200 = vadd.f32 %v173, %v198
    %v201 = vadd.f32 %v176, %v198
    %v202 = vadd.f32 %v179, %v198
    %v203 = vadd.f32 %v182, %v198
    %v204 = vadd.f32 %v185, %v198
    %v205 = vadd.f32 %v188, %v198
    %v206 = vadd.f32 %v191, %v198
    %v207 = vadd.f32 %v194, %v198
    %v208 = vtanh.pop %v200
    %v209 = vtanh.pop %v201
    %v210 = vtanh.pop %v202
    %v211 = vtanh.pop %v203
    %v212 = vtanh.pop %v204
    %v213 = vtanh.pop %v205
    %v214 = vtanh.pop %v206
    %v215 = vtanh.pop %v207
    %v216 = vld [vmem:[%s6] sm:$0x1]
    %v218 = vperm.slane %v216, 0
    %v220 = vmul.f32 %v208, %v218
    %v221 = vmul.f32 %v209, %v218
    %v222 = vmul.f32 %v210, %v218
    %v223 = vmul.f32 %v211, %v218
    %v224 = vmul.f32 %v212, %v218
    %v225 = vmul.f32 %v213, %v218
    %v226 = vmul.f32 %v214, %v218
    %v227 = vmul.f32 %v215, %v218
    %vm228 = vcmask 130048
    %v229 = vsel %vm228, %v220, 0.0
    %230 = vadd.xlane.f32.xlu0 %v229
    %v231 = vpop.xlane.xlu0 %230
    %v232 = vsel %vm228, %v221, 0.0
    %233 = vadd.xlane.f32.xlu0 %v232
    %v234 = vpop.xlane.xlu0 %233
    %v235 = vsel %vm228, %v222, 0.0
    %236 = vadd.xlane.f32.xlu0 %v235
    %v237 = vpop.xlane.xlu0 %236
    %v238 = vsel %vm228, %v223, 0.0
    %239 = vadd.xlane.f32.xlu0 %v238
    %v240 = vpop.xlane.xlu0 %239
    %v241 = vsel %vm228, %v224, 0.0
    %242 = vadd.xlane.f32.xlu0 %v241
    %v243 = vpop.xlane.xlu0 %242
    %v244 = vsel %vm228, %v225, 0.0
    %245 = vadd.xlane.f32.xlu0 %v244
    %v246 = vpop.xlane.xlu0 %245
    %v247 = vsel %vm228, %v226, 0.0
    %248 = vadd.xlane.f32.xlu0 %v247
    %v249 = vpop.xlane.xlu0 %248
    %v250 = vsel %vm228, %v227, 0.0
    %251 = vadd.xlane.f32.xlu0 %v250
    %v252 = vpop.xlane.xlu0 %251
    %v253 = vld [vmem:[%s2] sm:$0xff]
    %v254 = vld [vmem:[%s2 + $0x8] sm:$0xff]
    %v255 = vld [vmem:[%s2 + $0x10] sm:$0xff]
    %v256 = vld [vmem:[%s2 + $0x18] sm:$0xff]
    %v257 = vld [vmem:[%s2 + $0x20] sm:$0xff]
    %v258 = vld [vmem:[%s2 + $0x28] sm:$0xff]
    %v259 = vld [vmem:[%s2 + $0x30] sm:$0xff]
    %v260 = vld [vmem:[%s2 + $0x38] sm:$0xff]
    %v261 = vadd.f32 %v231, %v253
    %v262 = vadd.f32 %v234, %v254
    %v263 = vadd.f32 %v237, %v255
    %v264 = vadd.f32 %v240, %v256
    %v265 = vadd.f32 %v243, %v257
    %v266 = vadd.f32 %v246, %v258
    %v267 = vadd.f32 %v249, %v259
    %v268 = vadd.f32 %v252, %v260
    %vm269 = vcmask 7168
    %v270 = vsel %vm269, %v261, -inf
    %v271 = vrot.slane %v270, 4
    %v272 = vmax.f32 %v270, %v271
    %v273 = vrot.slane %v272, 2
    %v274 = vmax.f32 %v272, %v273
    %v275 = vrot.slane %v274, 1
    %v276 = vmax.f32 %v274, %v275
    %v277 = vsel %vm269, %v262, -inf
    %v278 = vrot.slane %v277, 4
    %v279 = vmax.f32 %v277, %v278
    %v280 = vrot.slane %v279, 2
    %v281 = vmax.f32 %v279, %v280
    %v282 = vrot.slane %v281, 1
    %v283 = vmax.f32 %v281, %v282
    %v284 = vsel %vm269, %v263, -inf
    %v285 = vrot.slane %v284, 4
    %v286 = vmax.f32 %v284, %v285
    %v287 = vrot.slane %v286, 2
    %v288 = vmax.f32 %v286, %v287
    %v289 = vrot.slane %v288, 1
    %v290 = vmax.f32 %v288, %v289
    %v291 = vsel %vm269, %v264, -inf
    %v292 = vrot.slane %v291, 4
    %v293 = vmax.f32 %v291, %v292
    %v294 = vrot.slane %v293, 2
    %v295 = vmax.f32 %v293, %v294
    %v296 = vrot.slane %v295, 1
    %v297 = vmax.f32 %v295, %v296
    %v298 = vsel %vm269, %v265, -inf
    %v299 = vrot.slane %v298, 4
    %v300 = vmax.f32 %v298, %v299
    %v301 = vrot.slane %v300, 2
    %v302 = vmax.f32 %v300, %v301
    %v303 = vrot.slane %v302, 1
    %v304 = vmax.f32 %v302, %v303
    %v305 = vsel %vm269, %v266, -inf
    %v306 = vrot.slane %v305, 4
    %v307 = vmax.f32 %v305, %v306
    %v308 = vrot.slane %v307, 2
    %v309 = vmax.f32 %v307, %v308
    %v310 = vrot.slane %v309, 1
    %v311 = vmax.f32 %v309, %v310
    %v312 = vsel %vm269, %v267, -inf
    %v313 = vrot.slane %v312, 4
    %v314 = vmax.f32 %v312, %v313
    %v315 = vrot.slane %v314, 2
    %v316 = vmax.f32 %v314, %v315
    %v317 = vrot.slane %v316, 1
    %v318 = vmax.f32 %v316, %v317
    %v319 = vsel %vm269, %v268, -inf
    %v320 = vrot.slane %v319, 4
    %v321 = vmax.f32 %v319, %v320
    %v322 = vrot.slane %v321, 2
    %v323 = vmax.f32 %v321, %v322
    %v324 = vrot.slane %v323, 1
    %v325 = vmax.f32 %v323, %v324
    %v326 = vsub.f32 %v261, %v276
    %v327 = vsub.f32 %v262, %v283
    %v328 = vsub.f32 %v263, %v290
    %v329 = vsub.f32 %v264, %v297
    %v330 = vsub.f32 %v265, %v304
    %v331 = vsub.f32 %v266, %v311
    %v332 = vsub.f32 %v267, %v318
    %v333 = vsub.f32 %v268, %v325
    %v334 = vmul.f32 %v326, 1.442695
    %v335 = vpow.pop %v334
    %v336 = vmul.f32 %v327, 1.442695
    %v337 = vpow.pop %v336
    %v338 = vmul.f32 %v328, 1.442695
    %v339 = vpow.pop %v338
    %v340 = vmul.f32 %v329, 1.442695
    %v341 = vpow.pop %v340
    %v342 = vmul.f32 %v330, 1.442695
    %v343 = vpow.pop %v342
    %v344 = vmul.f32 %v331, 1.442695
    %v345 = vpow.pop %v344
    %v346 = vmul.f32 %v332, 1.442695
    %v347 = vpow.pop %v346
    %v348 = vmul.f32 %v333, 1.442695
    %v349 = vpow.pop %v348
    %v350 = vsel %vm269, %v335, 0.0
    %v351 = vrot.slane %v350, 4
    %v352 = vadd.f32 %v350, %v351
    %v353 = vrot.slane %v352, 2
    %v354 = vadd.f32 %v352, %v353
    %v355 = vrot.slane %v354, 1
    %v356 = vadd.f32 %v354, %v355
    %v357 = vsel %vm269, %v337, 0.0
    %v358 = vrot.slane %v357, 4
    %v359 = vadd.f32 %v357, %v358
    %v360 = vrot.slane %v359, 2
    %v361 = vadd.f32 %v359, %v360
    %v362 = vrot.slane %v361, 1
    %v363 = vadd.f32 %v361, %v362
    %v364 = vsel %vm269, %v339, 0.0
    %v365 = vrot.slane %v364, 4
    %v366 = vadd.f32 %v364, %v365
    %v367 = vrot.slane %v366, 2
    %v368 = vadd.f32 %v366, %v367
    %v369 = vrot.slane %v368, 1
    %v370 = vadd.f32 %v368, %v369
    %v371 = vsel %vm269, %v341, 0.0
    %v372 = vrot.slane %v371, 4
    %v373 = vadd.f32 %v371, %v372
    %v374 = vrot.slane %v373, 2
    %v375 = vadd.f32 %v373, %v374
    %v376 = vrot.slane %v375, 1
    %v377 = vadd.f32 %v375, %v376
    %v378 = vsel %vm269, %v343, 0.0
    %v379 = vrot.slane %v378, 4
    %v380 = vadd.f32 %v378, %v379
    %v381 = vrot.slane %v380, 2
    %v382 = vadd.f32 %v380, %v381
    %v383 = vrot.slane %v382, 1
    %v384 = vadd.f32 %v382, %v383
    %v385 = vsel %vm269, %v345, 0.0
    %v386 = vrot.slane %v385, 4
    %v387 = vadd.f32 %v385, %v386
    %v388 = vrot.slane %v387, 2
    %v389 = vadd.f32 %v387, %v388
    %v390 = vrot.slane %v389, 1
    %v391 = vadd.f32 %v389, %v390
    %v392 = vsel %vm269, %v347, 0.0
    %v393 = vrot.slane %v392, 4
    %v394 = vadd.f32 %v392, %v393
    %v395 = vrot.slane %v394, 2
    %v396 = vadd.f32 %v394, %v395
    %v397 = vrot.slane %v396, 1
    %v398 = vadd.f32 %v396, %v397
    %v399 = vsel %vm269, %v349, 0.0
    %v400 = vrot.slane %v399, 4
    %v401 = vadd.f32 %v399, %v400
    %v402 = vrot.slane %v401, 2
    %v403 = vadd.f32 %v401, %v402
    %v404 = vrot.slane %v403, 1
    %v405 = vadd.f32 %v403, %v404
    %v406 = vrcp.pop %v356
    %v407 = vrcp.pop %v363
    %v408 = vrcp.pop %v370
    %v409 = vrcp.pop %v377
    %v410 = vrcp.pop %v384
    %v411 = vrcp.pop %v391
    %v412 = vrcp.pop %v398
    %v413 = vrcp.pop %v405
    %v414 = vmul.f32 %v356, %v406
    %v415 = vmul.f32 %v363, %v407
    %v416 = vmul.f32 %v370, %v408
    %v417 = vmul.f32 %v377, %v409
    %v418 = vmul.f32 %v384, %v410
    %v419 = vmul.f32 %v391, %v411
    %v420 = vmul.f32 %v398, %v412
    %v421 = vmul.f32 %v405, %v413
    %v422 = vsub.f32 2.0, %v414
    %v423 = vsub.f32 2.0, %v415
    %v424 = vsub.f32 2.0, %v416
    %v425 = vsub.f32 2.0, %v417
    %v426 = vsub.f32 2.0, %v418
    %v427 = vsub.f32 2.0, %v419
    %v428 = vsub.f32 2.0, %v420
    %v429 = vsub.f32 2.0, %v421
    %v430 = vmul.f32 %v406, %v422
    %v431 = vmul.f32 %v407, %v423
    %v432 = vmul.f32 %v408, %v424
    %v433 = vmul.f32 %v409, %v425
    %v434 = vmul.f32 %v410, %v426
    %v435 = vmul.f32 %v411, %v427
    %v436 = vmul.f32 %v412, %v428
    %v437 = vmul.f32 %v413, %v429
    %v438 = vmul.f32 %v335, %v430
    %v439 = vmul.f32 %v337, %v431
    %v440 = vmul.f32 %v339, %v432
    %v441 = vmul.f32 %v341, %v433
    %v442 = vmul.f32 %v343, %v434
    %v443 = vmul.f32 %v345, %v435
    %v444 = vmul.f32 %v347, %v436
    %v445 = vmul.f32 %v349, %v437
    %447 = vset.pattern.permute.xlu0 0
    %448 = vperm.xlu0 %447, %v438
    %v449 = vpop.permute.xlu0 %448
    %452 = vset.pattern.permute.xlu0 0
    %453 = vperm.xlu0 %452, %v439
    %v454 = vpop.permute.xlu0 %453
    %457 = vset.pattern.permute.xlu0 0
    %458 = vperm.xlu0 %457, %v440
    %v459 = vpop.permute.xlu0 %458
    %462 = vset.pattern.permute.xlu0 0
    %463 = vperm.xlu0 %462, %v441
    %v464 = vpop.permute.xlu0 %463
    %467 = vset.pattern.permute.xlu0 0
    %468 = vperm.xlu0 %467, %v442
    %v469 = vpop.permute.xlu0 %468
    %472 = vset.pattern.permute.xlu0 0
    %473 = vperm.xlu0 %472, %v443
    %v474 = vpop.permute.xlu0 %473
    %477 = vset.pattern.permute.xlu0 0
    %478 = vperm.xlu0 %477, %v444
    %v479 = vpop.permute.xlu0 %478
    %482 = vset.pattern.permute.xlu0 0
    %483 = vperm.xlu0 %482, %v445
    %v484 = vpop.permute.xlu0 %483
    %v486 = vmul.f32 %v449, %v29
    %v487 = vmul.f32 %v454, %v30
    %v488 = vmul.f32 %v459, %v31
    %v489 = vmul.f32 %v464, %v32
    %v490 = vmul.f32 %v469, %v33
    %v491 = vmul.f32 %v474, %v34
    %v492 = vmul.f32 %v479, %v35
    %v493 = vmul.f32 %v484, %v36
    %v494 = vsel %vm73, %v486, 0.0
    %v495 = vrot.slane %v494, 4
    %v496 = vadd.f32 %v494, %v495
    %v497 = vrot.slane %v496, 2
    %v498 = vadd.f32 %v496, %v497
    %v499 = vrot.slane %v498, 1
    %v500 = vadd.f32 %v498, %v499
    %v501 = vsel %vm73, %v487, 0.0
    %v502 = vrot.slane %v501, 4
    %v503 = vadd.f32 %v501, %v502
    %v504 = vrot.slane %v503, 2
    %v505 = vadd.f32 %v503, %v504
    %v506 = vrot.slane %v505, 1
    %v507 = vadd.f32 %v505, %v506
    %v508 = vsel %vm73, %v488, 0.0
    %v509 = vrot.slane %v508, 4
    %v510 = vadd.f32 %v508, %v509
    %v511 = vrot.slane %v510, 2
    %v512 = vadd.f32 %v510, %v511
    %v513 = vrot.slane %v512, 1
    %v514 = vadd.f32 %v512, %v513
    %v515 = vsel %vm73, %v489, 0.0
    %v516 = vrot.slane %v515, 4
    %v517 = vadd.f32 %v515, %v516
    %v518 = vrot.slane %v517, 2
    %v519 = vadd.f32 %v517, %v518
    %v520 = vrot.slane %v519, 1
    %v521 = vadd.f32 %v519, %v520
    %v522 = vsel %vm73, %v490, 0.0
    %v523 = vrot.slane %v522, 4
    %v524 = vadd.f32 %v522, %v523
    %v525 = vrot.slane %v524, 2
    %v526 = vadd.f32 %v524, %v525
    %v527 = vrot.slane %v526, 1
    %v528 = vadd.f32 %v526, %v527
    %v529 = vsel %vm73, %v491, 0.0
    %v530 = vrot.slane %v529, 4
    %v531 = vadd.f32 %v529, %v530
    %v532 = vrot.slane %v531, 2
    %v533 = vadd.f32 %v531, %v532
    %v534 = vrot.slane %v533, 1
    %v535 = vadd.f32 %v533, %v534
    %v536 = vsel %vm73, %v492, 0.0
    %v537 = vrot.slane %v536, 4
    %v538 = vadd.f32 %v536, %v537
    %v539 = vrot.slane %v538, 2
    %v540 = vadd.f32 %v538, %v539
    %v541 = vrot.slane %v540, 1
    %v542 = vadd.f32 %v540, %v541
    %v543 = vsel %vm73, %v493, 0.0
    %v544 = vrot.slane %v543, 4
    %v545 = vadd.f32 %v543, %v544
    %v546 = vrot.slane %v545, 2
    %v547 = vadd.f32 %v545, %v546
    %v548 = vrot.slane %v547, 1
    %v549 = vadd.f32 %v547, %v548
    %v550 = vadd.f32 %v500, %v37
    %v551 = vadd.f32 %v507, %v38
    %v552 = vadd.f32 %v514, %v39
    %v553 = vadd.f32 %v521, %v40
    %v554 = vadd.f32 %v528, %v41
    %v555 = vadd.f32 %v535, %v42
    %v556 = vadd.f32 %v542, %v43
    %v557 = vadd.f32 %v549, %v44
    %vm558 = vcmask 385024
    %559 = vst.msk [vmem:[#allocation2] sm:$0x1] %vm558, %v550
    %560 = vst.msk [vmem:[#allocation2 + $0x1] sm:$0x1] %vm558, %v551
    %561 = vst.msk [vmem:[#allocation2 + $0x2] sm:$0x1] %vm558, %v552
    %562 = vst.msk [vmem:[#allocation2 + $0x3] sm:$0x1] %vm558, %v553
    %563 = vst.msk [vmem:[#allocation2 + $0x4] sm:$0x1] %vm558, %v554
    %564 = vst.msk [vmem:[#allocation2 + $0x5] sm:$0x1] %vm558, %v555
    %565 = vst.msk [vmem:[#allocation2 + $0x6] sm:$0x1] %vm558, %v556
    %566 = vst.msk [vmem:[#allocation2 + $0x7] sm:$0x1] %vm558, %v557
    %567 = vst.msk [vmem:[%s8] sm:$0xff] %vm269, %v438
    %568 = vst.msk [vmem:[%s8 + $0x8] sm:$0xff] %vm269, %v439
    %569 = vst.msk [vmem:[%s8 + $0x10] sm:$0xff] %vm269, %v440
    %570 = vst.msk [vmem:[%s8 + $0x18] sm:$0xff] %vm269, %v441
    %571 = vst.msk [vmem:[%s8 + $0x20] sm:$0xff] %vm269, %v442
    %572 = vst.msk [vmem:[%s8 + $0x28] sm:$0xff] %vm269, %v443
    %573 = vst.msk [vmem:[%s8 + $0x30] sm:$0xff] %vm269, %v444
    %574 = vst.msk [vmem:[%s8 + $0x38] sm:$0xff] %vm269, %v445
    // Predicated region
    $region30: #{tpu_custom_call.1} parent=1 // pred_check
      _
    $region31: #{tpu_custom_call.1} parent=1 // pred_check_branch
      %576 = sbr.rel (0) target = $region33
    $region32: #{tpu_custom_call.1} parent=1 // pred_region
      %578 = vsyncadd [#allocation3], 0
      %s579 = sshll.u32 [#allocation2], 4
      %s580 = int_to_ptr.vmem [resolvable:$true] %s579
      %s581 = sshll.u32 %s7, 4
      %s582 = int_to_ptr.hbm [resolvable:$true] %s581
      %587 = dma.vmem_to_hbm [thread:$0]  %s580, 128, %s582, [#allocation3], 16, 16, 1
    $region33: #{tpu_custom_call.1} parent=1 // pred_fallthru
      _
    // Predicated region
    $region34: #{tpu_custom_call.1} parent=1 // pred_check
      _
    $region35: #{tpu_custom_call.1} parent=1 // pred_check_branch
      %589 = sbr.rel (0) target = $region37
    $region36: #{tpu_custom_call.1} parent=1 // pred_region
      _
    $region37: #{tpu_custom_call.1} parent=1 // pred_fallthru
      _
    // Predicated region
    $region38: #{tpu_custom_call.1} parent=1 // pred_check
      _
    $region39: #{tpu_custom_call.1} parent=1 // pred_check_branch
      %591 = sbr.rel (0) target = $region41
    $region40: #{tpu_custom_call.1} parent=1 // pred_region
      %593 = dma.done [#allocation3], 128
    $region41: #{tpu_custom_call.1} parent=1 // pred_fallthru
      _
    // Predicated region
    $region42: #{tpu_custom_call.1} parent=1 // pred_check
      _
    $region43: #{tpu_custom_call.1} parent=1 // pred_check_branch
      %595 = sbr.rel (0) target = $region45
    $region44: #{tpu_custom_call.1} parent=1 // pred_region
      _
    $region45: #{tpu_custom_call.1} parent=1 // pred_fallthru
      _
    %596 = vsyncpa [#allocation3], 1

</llo_original>
